<compile_context>
chip_gen: v6e
topology: v6e:2x2x1
jax: 0.10.0
libtpu: 0.0.40
codegen_flags: <defaults>
</compile_context>

<pallas_src>
import functools

import jax
import jax.numpy as jnp
from jax.experimental import pallas as pl
from jax.experimental.pallas import tpu as pltpu


def _round_up(x, m):
    return (x + m - 1) // m * m


def _vmem_capacity_bytes():
    """Physical VMEM of the current TPU generation (conservative fallback)."""
    try:
        return int(pltpu.get_tpu_info().vmem_capacity_bytes)
    except Exception:
        return 64 * 2**20  # v7x-sized fallback: safe on every generation


def _pick_reduction_chunk(D, D2, target_k=512):
    """Smallest divisor c of D with c*D2 >= target_k (else the full D)."""
    for c in range(1, D + 1):
        if D % c:
            continue
        if c * D2 >= target_k:
            return c
    return D


# ----------------------------------------------------------------------------
# Kernels
# ----------------------------------------------------------------------------
def _resident_kernel(x1_ref, x23_ref, v_ref, bias_ref, out_ref,
                     acc_ref, g_ref, *, chunk, d2):
    """V fully VMEM-resident; full i-contraction inside one grid step."""
    x1 = x1_ref[...]                      # (tb, D)
    x23 = x23_ref[...]                    # (tb, D^2)
    d = x1.shape[1]
    kc = chunk * d2

    acc_ref[...] = jnp.zeros_like(acc_ref)
    for ch in range(d // chunk):
        # Build G chunk (tb, chunk*D^2) in VMEM scratch with static lane
        # offsets, then issue one deep (K = chunk*D^2) MXU matmul.
        for il in range(chunk):
            i = ch * chunk + il
            g_ref[:, il * d2:(il + 1) * d2] = x1[:, i:i + 1] * x23
        acc_ref[...] += jnp.dot(
            g_ref[...], v_ref[ch * kc:(ch + 1) * kc, :],
            preferred_element_type=jnp.float32)

    out_ref[...] = (acc_ref[...] + bias_ref[...]).astype(out_ref.dtype)


def _streamed_kernel(x1_ref, x23_ref, v_ref, bias_ref, out_ref, acc_ref):
    """Fallback for huge D: V streamed in double-buffered (D^2, Lp) slices."""
    i = pl.program_id(1)

    @pl.when(i == 0)
    def _():
        acc_ref[...] = jnp.zeros_like(acc_ref)

    # Select x1[:, i] without dynamic lane slicing (masked lane reduction).
    x1 = x1_ref[...]                                              # (tb, D)
    lane = jax.lax.broadcasted_iota(jnp.int32, x1.shape, 1)
    x1_i = jnp.sum(jnp.where(lane == i, x1, 0.0),
                   axis=1, keepdims=True)                         # (tb, 1)

    g = x1_i * x23_ref[...]                                       # (tb, D^2)
    # At large D, K = D^2 is already >= 256, so the MXU K dim is filled.
    acc_ref[...] += jnp.dot(g, v_ref[...],
                            preferred_element_type=jnp.float32)

    @pl.when(i == pl.num_programs(1) - 1)
    def _():
        out_ref[...] = (acc_ref[...] + bias_ref[...]).astype(out_ref.dtype)


# ----------------------------------------------------------------------------
# Parameter preparation (hoisted out of the forward hot path)
# ----------------------------------------------------------------------------
def prepare_params(V, bias):
    """One-time layout glue.

    Returns (vr, bias2, output_dim) with
      vr[i*D^2 + j*D + k, l] = V[l, i, j, k], zero-padded on l to a multiple
      of 128 lanes (lane-dense MXU N / stores), and bias2 the (1, Lp) row.
    """
    L, D = V.shape[0], V.shape[1]
    D2, D3 = D * D, D * D * D
    Lp = _round_up(max(L, 128), 128)

    vr = jnp.transpose(V, (1, 2, 3, 0)).reshape(D3, L).astype(jnp.float32)
    bias_p = bias.astype(jnp.float32)
    if Lp != L:
        vr = jnp.pad(vr, ((0, 0), (0, Lp - L)))
        bias_p = jnp.pad(bias_p, (0, Lp - L))
    return vr, bias_p.reshape(1, Lp), L


# ----------------------------------------------------------------------------
# Forward
# ----------------------------------------------------------------------------
def three_word_tensor_regression(x1, x2, x3, vr, bias2, output_dim, *, tb=None):
    """x1, x2, x3: (B, D) f32.  vr/bias2 from prepare_params.  Returns (B, L)."""
    B, D = x1.shape
    D2, D3 = D * D, D * D * D
    Lp = vr.shape[-1]
    f32 = 4

    vmem_cap = _vmem_capacity_bytes()
    vmem_budget = int(0.85 * vmem_cap)

    # Batch tile: fill the MXU M dim and amortize per-step overhead / V reads.
    if tb is None:
        tb = 512 if vmem_cap >= 96 * 2**20 else 256   # v5e/v6e vs v7x
    tb = _round_up(min(tb, _round_up(B, 8)), 8)
    n_b = pl.cdiv(B, tb)
    Bp = n_b * tb

    # Small pair product (B, D^2): x23[b, j*D+k] = x2[b,j] * x3[b,k]
    # (tiny wrapper glue; the x1 factor is folded in inside the kernel).
    x23 = (x2[:, :, None] * x3[:, None, :]).reshape(B, D2)
    if Bp != B:
        x1 = jnp.pad(x1, ((0, Bp - B), (0, 0)))
        x23 = jnp.pad(x23, ((0, Bp - B), (0, 0)))

    v_bytes = D3 * Lp * f32
    chunk = _pick_reduction_chunk(D, D2)
    kc = chunk * D2

    common_bytes = (2 * tb * D + 2 * tb * D2 + 2 * Lp
                    + 2 * tb * Lp + tb * Lp) * f32      # x1/x23/bias/out/acc
    resident_bytes = common_bytes + 2 * v_bytes + tb * kc * f32
    use_resident = resident_bytes <= vmem_budget

    if use_resident:
        grid = (n_b,)
        kernel = functools.partial(_resident_kernel, chunk=chunk, d2=D2)
        in_specs = [
            pl.BlockSpec((tb, D), lambda b: (b, 0)),          # x1 tile
            pl.BlockSpec((tb, D2), lambda b: (b, 0)),         # x23 tile
            pl.BlockSpec((D3, Lp), lambda b: (0, 0)),         # resident V
            pl.BlockSpec((1, Lp), lambda b: (0, 0)),          # bias
        ]
        out_spec = pl.BlockSpec((tb, Lp), lambda b: (b, 0))
        scratch = [pltpu.VMEM((tb, Lp), jnp.float32),         # f32 accumulator
                   pltpu.VMEM((tb, kc), jnp.float32)]         # G chunk
        semantics = ("parallel",)
        vmem_est = resident_bytes
        v_arg = vr
        v_hbm_reads = 1
    else:
        grid = (n_b, D)
        kernel = _streamed_kernel
        in_specs = [
            pl.BlockSpec((tb, D), lambda b, i: (b, 0)),
            pl.BlockSpec((tb, D2), lambda b, i: (b, 0)),
            # Only operand whose block changes per reduction step; add
            # pipeline_mode=pl.Buffered(3) here if xprof shows exposed DMA.
            pl.BlockSpec((None, D2, Lp), lambda b, i: (i, 0, 0)),
            pl.BlockSpec((1, Lp), lambda b, i: (0, 0)),
        ]
        out_spec = pl.BlockSpec((tb, Lp), lambda b, i: (b, 0))
        scratch = [pltpu.VMEM((tb, Lp), jnp.float32)]
        semantics = ("parallel", "arbitrary")
        vmem_est = common_bytes + 2 * D2 * Lp * f32
        v_arg = vr.reshape(D, D2, Lp)                         # metadata reshape
        v_hbm_reads = n_b

    vmem_limit = int(min(max(int(1.5 * vmem_est), 32 * 2**20), vmem_budget))

    cost = pl.CostEstimate(
        flops=2 * Bp * D3 * Lp + Bp * D3,
        transcendentals=0,
        bytes_accessed=(Bp * D + Bp * D2 + v_hbm_reads * D3 * Lp
                        + Lp + Bp * Lp) * f32,
    )

    out = pl.pallas_call(
        kernel,
        out_shape=jax.ShapeDtypeStruct((Bp, Lp), x1.dtype),
        grid=grid,
        in_specs=in_specs,
        out_specs=out_spec,
        scratch_shapes=scratch,
        compiler_params=pltpu.CompilerParams(
            dimension_semantics=semantics,
            vmem_limit_bytes=vmem_limit),
        cost_estimate=cost,
    )(x1, x23, v_arg, bias2)

    return out[:B, :output_dim]


def init_params(key, input_dim, output_dim):
    """Parameters matching the PyTorch module's shapes.

    V: (output_dim, input_dim, input_dim, input_dim), xavier-uniform per slice
    (fan_in = fan_out = input_dim**2  ->  bound = sqrt(3) / input_dim).
    bias: zeros(output_dim).
    """
    bound = jnp.sqrt(3.0) / input_dim
    V = jax.random.uniform(
        key, (output_dim, input_dim, input_dim, input_dim),
        minval=-bound, maxval=bound, dtype=jnp.float32)
    bias = jnp.zeros((output_dim,), dtype=jnp.float32)
    return V, bias


if __name__ == "__main__":
    input_dim, output_dim, batch = 8, 16, 4

    key = jax.random.PRNGKey(0)
    k_v, k1, k2, k3 = jax.random.split(key, 4)

    V, bias = init_params(k_v, input_dim, output_dim)
    x1 = jax.random.normal(k1, (batch, input_dim), dtype=jnp.float32)
    x2 = jax.random.normal(k2, (batch, input_dim), dtype=jnp.float32)
    x3 = jax.random.normal(k3, (batch, input_dim), dtype=jnp.float32)

    # One-time parameter layout preparation (hoisted out of the hot path).
    vr, bias2, out_dim = prepare_params(V, bias)

    out = three_word_tensor_regression(x1, x2, x3, vr, bias2, out_dim)
    out = jax.block_until_ready(out)

    # Pure-JAX reference (same semantics as the torch.einsum in forward()),
    # at full f32 precision so the comparison is meaningful.
    ref = jnp.einsum("lijk,bi,bj,bk->bl", V, x1, x2, x3,
                     precision=jax.lax.Precision.HIGHEST) + bias
    assert out.shape == (batch, output_dim)
    assert jnp.allclose(out, ref, atol=1e-4, rtol=1e-4), (
        f"max err = {jnp.max(jnp.abs(out - ref))}")

    print("KERNEL_OK")
</pallas_src>

<mosaic_0001>
module attributes {stable_mosaic.version = 11 : i64} {
  func.func @_resident_kernel(%arg0: i32, %arg1: memref<8x8xf32, #tpu.memory_space<vmem>>, %arg2: memref<8x64xf32, #tpu.memory_space<vmem>>, %arg3: memref<512x128xf32, #tpu.memory_space<vmem>>, %arg4: memref<1x128xf32, #tpu.memory_space<vmem>>, %arg5: memref<8x128xf32, #tpu.memory_space<vmem>>, %arg6: memref<8x128xf32, #tpu.memory_space<vmem>>, %arg7: memref<8x512xf32, #tpu.memory_space<vmem>>) attributes {dimension_semantics = [#tpu.dimension_semantics<parallel>], iteration_bounds = array<i64: 1>, scalar_prefetch = 0 : i64, scratch_operands = 2 : i64, tpu.core_type = #tpu.core_type<tc>, window_params = [{transform_indices = @transform_0, window_bounds = array<i64: 8, 8>}, {transform_indices = @transform_1, window_bounds = array<i64: 8, 64>}, {pipeline_mode = #tpu.pipeline_mode<synchronous>, transform_indices = @transform_2, window_bounds = array<i64: 512, 128>}, {pipeline_mode = #tpu.pipeline_mode<synchronous>, transform_indices = @transform_3, window_bounds = array<i64: 1, 128>}, {transform_indices = @transform_4, window_bounds = array<i64: 8, 128>}]} {
    %c0 = arith.constant 0 : index
    %c0_0 = arith.constant 0 : index
    %0 = vector.load %arg1[%c0, %c0_0] : memref<8x8xf32, #tpu.memory_space<vmem>>, vector<8x8xf32>
    %c0_1 = arith.constant 0 : index
    %c0_2 = arith.constant 0 : index
    %1 = vector.load %arg2[%c0_1, %c0_2] : memref<8x64xf32, #tpu.memory_space<vmem>>, vector<8x64xf32>
    %cst = arith.constant 0.000000e+00 : f32
    %2 = vector.broadcast %cst : f32 to vector<8x128xf32>
    %c0_3 = arith.constant 0 : index
    %c0_4 = arith.constant 0 : index
    %3 = vector.load %arg6[%c0_3, %c0_4] : memref<8x128xf32, #tpu.memory_space<vmem>>, vector<8x128xf32>
    tpu.vector_store %arg6[%c0_3, %c0_4], %2 {strides = array<i32>} : memref<8x128xf32, #tpu.memory_space<vmem>>, vector<8x128xf32>,
    %4 = vector.extract_strided_slice %0 {offsets = [0, 0], sizes = [8, 1], strides = [1, 1]} : vector<8x8xf32> to vector<8x1xf32>
    %5 = vector.broadcast %4 : vector<8x1xf32> to vector<8x64xf32>
    %6 = arith.mulf %5, %1 : vector<8x64xf32>
    %c0_5 = arith.constant 0 : index
    %c0_6 = arith.constant 0 : index
    %7 = vector.load %arg7[%c0_5, %c0_6] : memref<8x512xf32, #tpu.memory_space<vmem>>, vector<8x64xf32>
    tpu.vector_store %arg7[%c0_5, %c0_6], %6 {strides = array<i32>} : memref<8x512xf32, #tpu.memory_space<vmem>>, vector<8x64xf32>,
    %8 = vector.extract_strided_slice %0 {offsets = [0, 1], sizes = [8, 1], strides = [1, 1]} : vector<8x8xf32> to vector<8x1xf32>
    %9 = vector.broadcast %8 : vector<8x1xf32> to vector<8x64xf32>
    %10 = arith.mulf %9, %1 : vector<8x64xf32>
    %c0_7 = arith.constant 0 : index
    %c64 = arith.constant 64 : index
    %11 = vector.load %arg7[%c0_7, %c64] : memref<8x512xf32, #tpu.memory_space<vmem>>, vector<8x64xf32>
    tpu.vector_store %arg7[%c0_7, %c64], %10 {strides = array<i32>} : memref<8x512xf32, #tpu.memory_space<vmem>>, vector<8x64xf32>,
    %12 = vector.extract_strided_slice %0 {offsets = [0, 2], sizes = [8, 1], strides = [1, 1]} : vector<8x8xf32> to vector<8x1xf32>
    %13 = vector.broadcast %12 : vector<8x1xf32> to vector<8x64xf32>
    %14 = arith.mulf %13, %1 : vector<8x64xf32>
    %c0_8 = arith.constant 0 : index
    %c128 = arith.constant 128 : index
    %15 = vector.load %arg7[%c0_8, %c128] : memref<8x512xf32, #tpu.memory_space<vmem>>, vector<8x64xf32>
    tpu.vector_store %arg7[%c0_8, %c128], %14 {strides = array<i32>} : memref<8x512xf32, #tpu.memory_space<vmem>>, vector<8x64xf32>,
    %16 = vector.extract_strided_slice %0 {offsets = [0, 3], sizes = [8, 1], strides = [1, 1]} : vector<8x8xf32> to vector<8x1xf32>
    %17 = vector.broadcast %16 : vector<8x1xf32> to vector<8x64xf32>
    %18 = arith.mulf %17, %1 : vector<8x64xf32>
    %c0_9 = arith.constant 0 : index
    %c192 = arith.constant 192 : index
    %19 = vector.load %arg7[%c0_9, %c192] : memref<8x512xf32, #tpu.memory_space<vmem>>, vector<8x64xf32>
    tpu.vector_store %arg7[%c0_9, %c192], %18 {strides = array<i32>} : memref<8x512xf32, #tpu.memory_space<vmem>>, vector<8x64xf32>,
    %20 = vector.extract_strided_slice %0 {offsets = [0, 4], sizes = [8, 1], strides = [1, 1]} : vector<8x8xf32> to vector<8x1xf32>
    %21 = vector.broadcast %20 : vector<8x1xf32> to vector<8x64xf32>
    %22 = arith.mulf %21, %1 : vector<8x64xf32>
    %c0_10 = arith.constant 0 : index
    %c256 = arith.constant 256 : index
    %23 = vector.load %arg7[%c0_10, %c256] : memref<8x512xf32, #tpu.memory_space<vmem>>, vector<8x64xf32>
    tpu.vector_store %arg7[%c0_10, %c256], %22 {strides = array<i32>} : memref<8x512xf32, #tpu.memory_space<vmem>>, vector<8x64xf32>,
    %24 = vector.extract_strided_slice %0 {offsets = [0, 5], sizes = [8, 1], strides = [1, 1]} : vector<8x8xf32> to vector<8x1xf32>
    %25 = vector.broadcast %24 : vector<8x1xf32> to vector<8x64xf32>
    %26 = arith.mulf %25, %1 : vector<8x64xf32>
    %c0_11 = arith.constant 0 : index
    %c320 = arith.constant 320 : index
    %27 = vector.load %arg7[%c0_11, %c320] : memref<8x512xf32, #tpu.memory_space<vmem>>, vector<8x64xf32>
    tpu.vector_store %arg7[%c0_11, %c320], %26 {strides = array<i32>} : memref<8x512xf32, #tpu.memory_space<vmem>>, vector<8x64xf32>,
    %28 = vector.extract_strided_slice %0 {offsets = [0, 6], sizes = [8, 1], strides = [1, 1]} : vector<8x8xf32> to vector<8x1xf32>
    %29 = vector.broadcast %28 : vector<8x1xf32> to vector<8x64xf32>
    %30 = arith.mulf %29, %1 : vector<8x64xf32>
    %c0_12 = arith.constant 0 : index
    %c384 = arith.constant 384 : index
    %31 = vector.load %arg7[%c0_12, %c384] : memref<8x512xf32, #tpu.memory_space<vmem>>, vector<8x64xf32>
    tpu.vector_store %arg7[%c0_12, %c384], %30 {strides = array<i32>} : memref<8x512xf32, #tpu.memory_space<vmem>>, vector<8x64xf32>,
    %32 = vector.extract_strided_slice %0 {offsets = [0, 7], sizes = [8, 1], strides = [1, 1]} : vector<8x8xf32> to vector<8x1xf32>
    %33 = vector.broadcast %32 : vector<8x1xf32> to vector<8x64xf32>
    %34 = arith.mulf %33, %1 : vector<8x64xf32>
    %c0_13 = arith.constant 0 : index
    %c448 = arith.constant 448 : index
    %35 = vector.load %arg7[%c0_13, %c448] : memref<8x512xf32, #tpu.memory_space<vmem>>, vector<8x64xf32>
    tpu.vector_store %arg7[%c0_13, %c448], %34 {strides = array<i32>} : memref<8x512xf32, #tpu.memory_space<vmem>>, vector<8x64xf32>,
    %c0_14 = arith.constant 0 : index
    %c0_15 = arith.constant 0 : index
    %36 = vector.load %arg6[%c0_14, %c0_15] : memref<8x128xf32, #tpu.memory_space<vmem>>, vector<8x128xf32>
    %c0_16 = arith.constant 0 : index
    %c0_17 = arith.constant 0 : index
    %37 = vector.load %arg7[%c0_16, %c0_17] : memref<8x512xf32, #tpu.memory_space<vmem>>, vector<8x512xf32>
    %c0_18 = arith.constant 0 : index
    %c0_19 = arith.constant 0 : index
    %38 = vector.load %arg3[%c0_18, %c0_19] : memref<512x128xf32, #tpu.memory_space<vmem>>, vector<512x128xf32>
    %cst_20 = arith.constant dense<0.000000e+00> : vector<8x128xf32>
    %39 = tpu.matmul %37, %38, %cst_20 {dimension_numbers = #tpu.dot_dimension_numbers<[1], [0], [0], [1], [0, 0, 1, 1], [], []>} : vector<8x512xf32>, vector<512x128xf32>, vector<8x128xf32> -> vector<8x128xf32>
    %40 = arith.addf %36, %39 : vector<8x128xf32>
    %c0_21 = arith.constant 0 : index
    %c0_22 = arith.constant 0 : index
    %41 = vector.load %arg6[%c0_21, %c0_22] : memref<8x128xf32, #tpu.memory_space<vmem>>, vector<8x128xf32>
    tpu.vector_store %arg6[%c0_21, %c0_22], %40 {strides = array<i32>} : memref<8x128xf32, #tpu.memory_space<vmem>>, vector<8x128xf32>,
    %c0_23 = arith.constant 0 : index
    %c0_24 = arith.constant 0 : index
    %42 = vector.load %arg6[%c0_23, %c0_24] : memref<8x128xf32, #tpu.memory_space<vmem>>, vector<8x128xf32>
    %c0_25 = arith.constant 0 : index
    %c0_26 = arith.constant 0 : index
    %43 = vector.load %arg4[%c0_25, %c0_26] : memref<1x128xf32, #tpu.memory_space<vmem>>, vector<1x128xf32>
    %44 = vector.broadcast %43 : vector<1x128xf32> to vector<8x128xf32>
    %45 = arith.addf %42, %44 : vector<8x128xf32>
    %c0_27 = arith.constant 0 : index
    %c0_28 = arith.constant 0 : index
    %46 = vector.load %arg5[%c0_27, %c0_28] : memref<8x128xf32, #tpu.memory_space<vmem>>, vector<8x128xf32>
    tpu.vector_store %arg5[%c0_27, %c0_28], %45 {strides = array<i32>} : memref<8x128xf32, #tpu.memory_space<vmem>>, vector<8x128xf32>,
    return
  }
  func.func @transform_0(%arg0: i32) -> (i32, i32) {
    %c0_i32 = arith.constant 0 : i32
    %c0_i32_0 = arith.constant 0 : i32
    return %arg0, %c0_i32 : i32, i32
  }
  func.func @transform_1(%arg0: i32) -> (i32, i32) {
    %c0_i32 = arith.constant 0 : i32
    %c0_i32_0 = arith.constant 0 : i32
    return %arg0, %c0_i32 : i32, i32
  }
  func.func @transform_2(%arg0: i32) -> (i32, i32) {
    %c0_i32 = arith.constant 0 : i32
    %c0_i32_0 = arith.constant 0 : i32
    %c0_i32_1 = arith.constant 0 : i32
    return %c0_i32, %c0_i32_0 : i32, i32
  }
  func.func @transform_3(%arg0: i32) -> (i32, i32) {
    %c0_i32 = arith.constant 0 : i32
    %c0_i32_0 = arith.constant 0 : i32
    %c0_i32_1 = arith.constant 0 : i32
    return %c0_i32, %c0_i32_0 : i32, i32
  }
  func.func @transform_4(%arg0: i32) -> (i32, i32) {
    %c0_i32 = arith.constant 0 : i32
    %c0_i32_0 = arith.constant 0 : i32
    return %arg0, %c0_i32 : i32, i32
  }
}

</mosaic_0001>

<llo_original>
// kernel: tpu_custom_call.1
$region0: #{tpu_custom_call.1}
  #allocation0 [shape = 'u32[]', space=smem, size = 0x4, offset = 0x4, fixed_abs, tag = 'smem constant byte address 0x4 - core index']
  #allocation1 [shape = 'u32[144,128]{1,0:T(1,128)}', space=vmem, size = 0x12000, scoped, tag = 'internal scratch']
  #allocation2 [shape = 'f32[8,128]{1,0:T(8,128)}', space=vmem, size = 0x1000, scoped, tag = 'scratch operand']
  #allocation3 [shape = 'f32[8,512]{1,0:T(8,128)}', space=vmem, size = 0x4000, scoped, tag = 'scratch operand']
  %s0 = inlined_call_operand.hbm [shape: f32[8,8], index: 0, kind: input, shape index: {}]
  %s1 = inlined_call_operand.hbm [shape: f32[8,64], index: 1, kind: input, shape index: {}]
  %s2 = inlined_call_operand.hbm [shape: f32[512,128], index: 2, kind: input, shape index: {}]
  %s3 = inlined_call_operand.vmem [shape: f32[1,128], index: 3, kind: input, shape index: {}]
  %s4 = inlined_call_operand.hbm [shape: f32[8,128], index: 4, kind: output, shape index: {}]
  %s5 = sld [smem:[#allocation0]]
  $region38: #{tpu_custom_call.1} parent=0
    _
  %s7 = ssub.s32 1, %s5
  %s8 = scalar_select 0, %s7, %s5
  $region1: #{tpu_custom_call.1} parent=0
    #allocation4 [shape = 'u8[4096]{0}', space=vmem, size = 0x1000, scoped, tag = 'input window, operand 0, single buffered']
    #allocation5 [shape = 's32[1]{0}', space=sflag, size = 0x4, scoped, tag = 'scoped memory for tpu_custom_call.1']
    #allocation6 [shape = 's32[1]{0}', space=sflag, size = 0x4, scoped, tag = 'scoped memory for tpu_custom_call.1']
    #allocation7 [shape = 'u8[4096]{0}', space=vmem, size = 0x1000, scoped, tag = 'input window, operand 1, single buffered']
    #allocation8 [shape = 's32[1]{0}', space=sflag, size = 0x4, scoped, tag = 'scoped memory for tpu_custom_call.1']
    #allocation9 [shape = 'u8[262144]{0}', space=vmem, size = 0x40000, scoped, tag = 'input window, operand 2, single buffered']
    #allocation10 [shape = 'u8[4096]{0}', space=vmem, size = 0x1000, scoped, tag = 'output window, operand 0, single buffered']
    %9 = vsyncpa [#allocation5], 0
    %10 = vsyncpa [#allocation8], 0
    %11 = vsyncpa [#allocation6], 0
    // Predicated region
    $region2: #{tpu_custom_call.1} parent=1 // pred_check
      _
    $region3: #{tpu_custom_call.1} parent=1 // pred_check_branch
      %13 = sbr.rel (0) target = $region5
    $region4: #{tpu_custom_call.1} parent=1 // pred_region
      %s15 = ssub.s32 128, 128
      %16 = vsyncadd [#allocation5], %s15
      %s18 = sshll.u32 [#allocation4], 4
      %s19 = int_to_ptr.vmem [resolvable:$true] %s18
      %21 = dma.hbm_to_vmem [thread:$0]  %s0, 128, %s19, [#allocation5]
    $region5: #{tpu_custom_call.1} parent=1 // pred_fallthru
      _
    // Predicated region
    $region6: #{tpu_custom_call.1} parent=1 // pred_check
      _
    $region7: #{tpu_custom_call.1} parent=1 // pred_check_branch
      %23 = sbr.rel (0) target = $region9
    $region8: #{tpu_custom_call.1} parent=1 // pred_region
      %s25 = ssub.s32 128, 128
      %26 = vsyncadd [#allocation8], %s25
      %s28 = sshll.u32 [#allocation7], 4
      %s29 = int_to_ptr.vmem [resolvable:$true] %s28
      %31 = dma.hbm_to_vmem [thread:$0]  %s1, 128, %s29, [#allocation8]
    $region9: #{tpu_custom_call.1} parent=1 // pred_fallthru
      _
    // Predicated region
    $region10: #{tpu_custom_call.1} parent=1 // pred_check
      _
    $region11: #{tpu_custom_call.1} parent=1 // pred_check_branch
      %33 = sbr.rel (0) target = $region13
    $region12: #{tpu_custom_call.1} parent=1 // pred_region
      %s35 = ssub.s32 8192, 8192
      %36 = vsyncadd [#allocation8], %s35
      %s37 = sshll.u32 [#allocation9], 4
      %s38 = int_to_ptr.vmem [resolvable:$true] %s37
      %43 = dma.hbm_to_vmem [thread:$0]  %s2, 8192, %s38, [#allocation8], 128, 128, 8
    $region13: #{tpu_custom_call.1} parent=1 // pred_fallthru
      _
    // Predicated region
    $region14: #{tpu_custom_call.1} parent=1 // pred_check
      _
    $region15: #{tpu_custom_call.1} parent=1 // pred_check_branch
      %45 = sbr.rel (0) target = $region17
    $region16: #{tpu_custom_call.1} parent=1 // pred_region
      _
    $region17: #{tpu_custom_call.1} parent=1 // pred_fallthru
      _
    // Predicated region
    $region18: #{tpu_custom_call.1} parent=1 // pred_check
      _
    $region19: #{tpu_custom_call.1} parent=1 // pred_check_branch
      %47 = sbr.rel (0) target = $region21
    $region20: #{tpu_custom_call.1} parent=1 // pred_region
      %48 = dma.done [#allocation5], 128
    $region21: #{tpu_custom_call.1} parent=1 // pred_fallthru
      _
    // Predicated region
    $region22: #{tpu_custom_call.1} parent=1 // pred_check
      _
    $region23: #{tpu_custom_call.1} parent=1 // pred_check_branch
      %50 = sbr.rel (0) target = $region25
    $region24: #{tpu_custom_call.1} parent=1 // pred_region
      %51 = dma.done [#allocation8], 128
    $region25: #{tpu_custom_call.1} parent=1 // pred_fallthru
      _
    // Predicated region
    $region26: #{tpu_custom_call.1} parent=1 // pred_check
      _
    $region27: #{tpu_custom_call.1} parent=1 // pred_check_branch
      %53 = sbr.rel (0) target = $region29
    $region28: #{tpu_custom_call.1} parent=1 // pred_region
      %54 = dma.done [#allocation8], 8192
    $region29: #{tpu_custom_call.1} parent=1 // pred_fallthru
      _
    %v55 = vld [vmem:[#allocation4] sm:$0xff]
    %v56 = vld [vmem:[#allocation7] sm:$0xff]
    %57 = vst [vmem:[#allocation2] sm:$0xff] 0.0
    %59 = vset.pattern.permute.xlu0 0
    %60 = vperm.xlu0 %59, %v55
    %v61 = vpop.permute.xlu0 %60
    %v63 = vmul.f32 %v61, %v56
    %vm64 = vcmask 523264
    %65 = vst.msk [vmem:[#allocation3] sm:$0xff] %vm64, %v63
    %66 = vset.pattern.permute.xlu0 1
    %67 = vperm.xlu0 %66, %v55
    %v68 = vpop.permute.xlu0 %67
    %v70 = vmul.f32 %v68, %v56
    %72 = vrot.lane.b32.xlu0 %v70, 64
    %v73 = vpop.permute.xlu0 %72
    %vm75 = vcmask 1048064
    %76 = vst.msk [vmem:[#allocation3] sm:$0xff] %vm75, %v73
    %77 = vset.pattern.permute.xlu0 2
    %78 = vperm.xlu0 %77, %v55
    %v79 = vpop.permute.xlu0 %78
    %v81 = vmul.f32 %v79, %v56
    %82 = vst.msk [vmem:[#allocation3 + $0x8] sm:$0xff] %vm64, %v81
    %83 = vset.pattern.permute.xlu0 3
    %84 = vperm.xlu0 %83, %v55
    %v85 = vpop.permute.xlu0 %84
    %v87 = vmul.f32 %v85, %v56
    %89 = vrot.lane.b32.xlu0 %v87, 64
    %v90 = vpop.permute.xlu0 %89
    %92 = vst.msk [vmem:[#allocation3 + $0x8] sm:$0xff] %vm75, %v90
    %93 = vset.pattern.permute.xlu0 4
    %94 = vperm.xlu0 %93, %v55
    %v95 = vpop.permute.xlu0 %94
    %v97 = vmul.f32 %v95, %v56
    %98 = vst.msk [vmem:[#allocation3 + $0x10] sm:$0xff] %vm64, %v97
    %99 = vset.pattern.permute.xlu0 5
    %100 = vperm.xlu0 %99, %v55
    %v101 = vpop.permute.xlu0 %100
    %v103 = vmul.f32 %v101, %v56
    %105 = vrot.lane.b32.xlu0 %v103, 64
    %v106 = vpop.permute.xlu0 %105
    %108 = vst.msk [vmem:[#allocation3 + $0x10] sm:$0xff] %vm75, %v106
    %109 = vset.pattern.permute.xlu0 6
    %110 = vperm.xlu0 %109, %v55
    %v111 = vpop.permute.xlu0 %110
    %v113 = vmul.f32 %v111, %v56
    %114 = vst.msk [vmem:[#allocation3 + $0x18] sm:$0xff] %vm64, %v113
    %115 = vset.pattern.permute.xlu0 7
    %116 = vperm.xlu0 %115, %v55
    %v117 = vpop.permute.xlu0 %116
    %v119 = vmul.f32 %v117, %v56
    %121 = vrot.lane.b32.xlu0 %v119, 64
    %v122 = vpop.permute.xlu0 %121
    %124 = vst.msk [vmem:[#allocation3 + $0x18] sm:$0xff] %vm75, %v122
    %v125 = vld [vmem:[#allocation2] sm:$0xff]
    %v126 = vld [vmem:[#allocation3] sm:$0xff]
    %v127 = vld [vmem:[#allocation3 + $0x8] sm:$0xff]
    %v128 = vld [vmem:[#allocation3 + $0x10] sm:$0xff]
    %v129 = vld [vmem:[#allocation3 + $0x18] sm:$0xff]
    %v130 = vld [vmem:[#allocation9] sm:$0xff]
    %v131 = vld [vmem:[#allocation9 + $0x8] sm:$0xff]
    %v132 = vld [vmem:[#allocation9 + $0x10] sm:$0xff]
    %v133 = vld [vmem:[#allocation9 + $0x18] sm:$0xff]
    %v134 = vld [vmem:[#allocation9 + $0x20] sm:$0xff]
    %v135 = vld [vmem:[#allocation9 + $0x28] sm:$0xff]
    %v136 = vld [vmem:[#allocation9 + $0x30] sm:$0xff]
    %v137 = vld [vmem:[#allocation9 + $0x38] sm:$0xff]
    %v138 = vld [vmem:[#allocation9 + $0x40] sm:$0xff]
    %v139 = vld [vmem:[#allocation9 + $0x48] sm:$0xff]
    %v140 = vld [vmem:[#allocation9 + $0x50] sm:$0xff]
    %v141 = vld [vmem:[#allocation9 + $0x58] sm:$0xff]
    %v142 = vld [vmem:[#allocation9 + $0x60] sm:$0xff]
    %v143 = vld [vmem:[#allocation9 + $0x68] sm:$0xff]
    %v144 = vld [vmem:[#allocation9 + $0x70] sm:$0xff]
    %v145 = vld [vmem:[#allocation9 + $0x78] sm:$0xff]
    %v146 = vld [vmem:[#allocation9 + $0x80] sm:$0xff]
    %v147 = vld [vmem:[#allocation9 + $0x88] sm:$0xff]
    %v148 = vld [vmem:[#allocation9 + $0x90] sm:$0xff]
    %v149 = vld [vmem:[#allocation9 + $0x98] sm:$0xff]
    %v150 = vld [vmem:[#allocation9 + $0xa0] sm:$0xff]
    %v151 = vld [vmem:[#allocation9 + $0xa8] sm:$0xff]
    %v152 = vld [vmem:[#allocation9 + $0xb0] sm:$0xff]
    %v153 = vld [vmem:[#allocation9 + $0xb8] sm:$0xff]
    %v154 = vld [vmem:[#allocation9 + $0xc0] sm:$0xff]
    %v155 = vld [vmem:[#allocation9 + $0xc8] sm:$0xff]
    %v156 = vld [vmem:[#allocation9 + $0xd0] sm:$0xff]
    %v157 = vld [vmem:[#allocation9 + $0xd8] sm:$0xff]
    %v158 = vld [vmem:[#allocation9 + $0xe0] sm:$0xff]
    %v159 = vld [vmem:[#allocation9 + $0xe8] sm:$0xff]
    %v160 = vld [vmem:[#allocation9 + $0xf0] sm:$0xff]
    %v161 = vld [vmem:[#allocation9 + $0xf8] sm:$0xff]
    %v162 = vld [vmem:[#allocation9 + $0x100] sm:$0xff]
    %v163 = vld [vmem:[#allocation9 + $0x108] sm:$0xff]
    %v164 = vld [vmem:[#allocation9 + $0x110] sm:$0xff]
    %v165 = vld [vmem:[#allocation9 + $0x118] sm:$0xff]
    %v166 = vld [vmem:[#allocation9 + $0x120] sm:$0xff]
    %v167 = vld [vmem:[#allocation9 + $0x128] sm:$0xff]
    %v168 = vld [vmem:[#allocation9 + $0x130] sm:$0xff]
    %v169 = vld [vmem:[#allocation9 + $0x138] sm:$0xff]
    %v170 = vld [vmem:[#allocation9 + $0x140] sm:$0xff]
    %v171 = vld [vmem:[#allocation9 + $0x148] sm:$0xff]
    %v172 = vld [vmem:[#allocation9 + $0x150] sm:$0xff]
    %v173 = vld [vmem:[#allocation9 + $0x158] sm:$0xff]
    %v174 = vld [vmem:[#allocation9 + $0x160] sm:$0xff]
    %v175 = vld [vmem:[#allocation9 + $0x168] sm:$0xff]
    %v176 = vld [vmem:[#allocation9 + $0x170] sm:$0xff]
    %v177 = vld [vmem:[#allocation9 + $0x178] sm:$0xff]
    %v178 = vld [vmem:[#allocation9 + $0x180] sm:$0xff]
    %v179 = vld [vmem:[#allocation9 + $0x188] sm:$0xff]
    %v180 = vld [vmem:[#allocation9 + $0x190] sm:$0xff]
    %v181 = vld [vmem:[#allocation9 + $0x198] sm:$0xff]
    %v182 = vld [vmem:[#allocation9 + $0x1a0] sm:$0xff]
    %v183 = vld [vmem:[#allocation9 + $0x1a8] sm:$0xff]
    %v184 = vld [vmem:[#allocation9 + $0x1b0] sm:$0xff]
    %v185 = vld [vmem:[#allocation9 + $0x1b8] sm:$0xff]
    %v186 = vld [vmem:[#allocation9 + $0x1c0] sm:$0xff]
    %v187 = vld [vmem:[#allocation9 + $0x1c8] sm:$0xff]
    %v188 = vld [vmem:[#allocation9 + $0x1d0] sm:$0xff]
    %v189 = vld [vmem:[#allocation9 + $0x1d8] sm:$0xff]
    %v190 = vld [vmem:[#allocation9 + $0x1e0] sm:$0xff]
    %v191 = vld [vmem:[#allocation9 + $0x1e8] sm:$0xff]
    %v192 = vld [vmem:[#allocation9 + $0x1f0] sm:$0xff]
    %v193 = vld [vmem:[#allocation9 + $0x1f8] sm:$0xff]
    %194 = vmatprep.subr.mxu0 0.0
    %195 = vmatpush1.msra.mxu0 %v145
    %196 = vmatprep.subr.mxu0 0.0
    %197 = vmatpush1.msra.mxu0 %v144
    %198 = vmatprep.subr.mxu0 0.0
    %199 = vmatpush1.msra.mxu0 %v143
    %200 = vmatprep.subr.mxu0 0.0
    %201 = vmatpush1.msra.mxu0 %v142
    %202 = vmatprep.subr.mxu0 0.0
    %203 = vmatpush1.msra.mxu0 %v141
    %204 = vmatprep.subr.mxu0 0.0
    %205 = vmatpush1.msra.mxu0 %v140
    %206 = vmatprep.subr.mxu0 0.0
    %207 = vmatpush1.msra.mxu0 %v139
    %208 = vmatprep.subr.mxu0 0.0
    %209 = vmatpush1.msra.mxu0 %v138
    %210 = vmatprep.subr.mxu0 0.0
    %211 = vmatpush1.msra.mxu0 %v137
    %212 = vmatprep.subr.mxu0 0.0
    %213 = vmatpush1.msra.mxu0 %v136
    %214 = vmatprep.subr.mxu0 0.0
    %215 = vmatpush1.msra.mxu0 %v135
    %216 = vmatprep.subr.mxu0 0.0
    %217 = vmatpush1.msra.mxu0 %v134
    %218 = vmatprep.subr.mxu0 0.0
    %219 = vmatpush1.msra.mxu0 %v133
    %220 = vmatprep.subr.mxu0 0.0
    %221 = vmatpush1.msra.mxu0 %v132
    %222 = vmatprep.subr.mxu0 0.0
    %223 = vmatpush1.msra.mxu0 %v131
    %224 = vmatprep.subr.mxu0 0.0
    %225 = vmatpush1.msra.mxu0 %v130
    %226 = vmatprep.subr.mxu0 0.0
    %227 = vmatpush2.msra.mxu0 %v161
    %228 = vmatprep.subr.mxu0 0.0
    %229 = vmatpush2.msra.mxu0 %v160
    %230 = vmatprep.subr.mxu0 0.0
    %231 = vmatpush2.msra.mxu0 %v159
    %232 = vmatprep.subr.mxu0 0.0
    %233 = vmatpush2.msra.mxu0 %v158
    %234 = vmatprep.subr.mxu0 0.0
    %235 = vmatpush2.msra.mxu0 %v157
    %236 = vmatprep.subr.mxu0 0.0
    %237 = vmatpush2.msra.mxu0 %v156
    %238 = vmatprep.subr.mxu0 0.0
    %239 = vmatpush2.msra.mxu0 %v155
    %240 = vmatprep.subr.mxu0 0.0
    %241 = vmatpush2.msra.mxu0 %v154
    %242 = vmatprep.subr.mxu0 0.0
    %243 = vmatpush2.msra.mxu0 %v153
    %244 = vmatprep.subr.mxu0 0.0
    %245 = vmatpush2.msra.mxu0 %v152
    %246 = vmatprep.subr.mxu0 0.0
    %247 = vmatpush2.msra.mxu0 %v151
    %248 = vmatprep.subr.mxu0 0.0
    %249 = vmatpush2.msra.mxu0 %v150
    %250 = vmatprep.subr.mxu0 0.0
    %251 = vmatpush2.msra.mxu0 %v149
    %252 = vmatprep.subr.mxu0 0.0
    %253 = vmatpush2.msra.mxu0 %v148
    %254 = vmatprep.subr.mxu0 0.0
    %255 = vmatpush2.msra.mxu0 %v147
    %256 = vmatprep.subr.mxu0 0.0
    %257 = vmatpush2.msra.mxu0 %v146
    %258 = vmatprep.mubr.f32.mxu0 %v127
    %259 = vmatmul.mubr.f32.gmra.mxu0 %v126
    %v260 = vpop.f32.mrf.mxu0
    %v261 = vadd.f32 0.0, %v260
    %v262 = vpop.f32.mrf.mxu0
    %263 = vdwg.mxu0
    %264 = vmatprep.subr.mxu0 0.0
    %265 = vmatpush1.msra.mxu0 %v177
    %266 = vmatprep.subr.mxu0 0.0
    %267 = vmatpush1.msra.mxu0 %v176
    %268 = vmatprep.subr.mxu0 0.0
    %269 = vmatpush1.msra.mxu0 %v175
    %270 = vmatprep.subr.mxu0 0.0
    %271 = vmatpush1.msra.mxu0 %v174
    %272 = vmatprep.subr.mxu0 0.0
    %273 = vmatpush1.msra.mxu0 %v173
    %274 = vmatprep.subr.mxu0 0.0
    %275 = vmatpush1.msra.mxu0 %v172
    %276 = vmatprep.subr.mxu0 0.0
    %277 = vmatpush1.msra.mxu0 %v171
    %278 = vmatprep.subr.mxu0 0.0
    %279 = vmatpush1.msra.mxu0 %v170
    %280 = vmatprep.subr.mxu0 0.0
    %281 = vmatpush1.msra.mxu0 %v169
    %282 = vmatprep.subr.mxu0 0.0
    %283 = vmatpush1.msra.mxu0 %v168
    %284 = vmatprep.subr.mxu0 0.0
    %285 = vmatpush1.msra.mxu0 %v167
    %286 = vmatprep.subr.mxu0 0.0
    %287 = vmatpush1.msra.mxu0 %v166
    %288 = vmatprep.subr.mxu0 0.0
    %289 = vmatpush1.msra.mxu0 %v165
    %290 = vmatprep.subr.mxu0 0.0
    %291 = vmatpush1.msra.mxu0 %v164
    %292 = vmatprep.subr.mxu0 0.0
    %293 = vmatpush1.msra.mxu0 %v163
    %294 = vmatprep.subr.mxu0 0.0
    %295 = vmatpush1.msra.mxu0 %v162
    %296 = vmatprep.subr.mxu0 0.0
    %297 = vmatpush2.msra.mxu0 %v193
    %298 = vmatprep.subr.mxu0 0.0
    %299 = vmatpush2.msra.mxu0 %v192
    %300 = vmatprep.subr.mxu0 0.0
    %301 = vmatpush2.msra.mxu0 %v191
    %302 = vmatprep.subr.mxu0 0.0
    %303 = vmatpush2.msra.mxu0 %v190
    %304 = vmatprep.subr.mxu0 0.0
    %305 = vmatpush2.msra.mxu0 %v189
    %306 = vmatprep.subr.mxu0 0.0
    %307 = vmatpush2.msra.mxu0 %v188
    %308 = vmatprep.subr.mxu0 0.0
    %309 = vmatpush2.msra.mxu0 %v187
    %310 = vmatprep.subr.mxu0 0.0
    %311 = vmatpush2.msra.mxu0 %v186
    %312 = vmatprep.subr.mxu0 0.0
    %313 = vmatpush2.msra.mxu0 %v185
    %314 = vmatprep.subr.mxu0 0.0
    %315 = vmatpush2.msra.mxu0 %v184
    %316 = vmatprep.subr.mxu0 0.0
    %317 = vmatpush2.msra.mxu0 %v183
    %318 = vmatprep.subr.mxu0 0.0
    %319 = vmatpush2.msra.mxu0 %v182
    %320 = vmatprep.subr.mxu0 0.0
    %321 = vmatpush2.msra.mxu0 %v181
    %322 = vmatprep.subr.mxu0 0.0
    %323 = vmatpush2.msra.mxu0 %v180
    %324 = vmatprep.subr.mxu0 0.0
    %325 = vmatpush2.msra.mxu0 %v179
    %326 = vmatprep.subr.mxu0 0.0
    %327 = vmatpush2.msra.mxu0 %v178
    %328 = vmatprep.mubr.f32.mxu0 %v129
    %329 = vmatmul.mubr.f32.gmra.mxu0 %v128
    %v330 = vpop.f32.mrf.mxu0
    %v331 = vadd.f32 %v261, %v330
    %v332 = vpop.f32.mrf.mxu0
    %333 = vdwg.mxu0
    %v334 = vadd.f32 %v125, %v331
    %335 = vst [vmem:[#allocation2] sm:$0xff] %v334
    %v336 = vld [vmem:[#allocation2] sm:$0xff]
    %v337 = vld [vmem:[%s3] sm:$0x1]
    %v339 = vlaneseq
    %v340 = vshrl.u32 %v339, 7
    %v341 = vsub.s32 0, %v340
    %v342 = vrot.slane %v337, %v341
    %v344 = vadd.f32 %v336, %v342
    %345 = vst [vmem:[#allocation10] sm:$0xff] %v344
    // Predicated region
    $region30: #{tpu_custom_call.1} parent=1 // pred_check
      _
    $region31: #{tpu_custom_call.1} parent=1 // pred_check_branch
      %347 = sbr.rel (0) target = $region33
    $region32: #{tpu_custom_call.1} parent=1 // pred_region
      %s349 = ssub.s32 128, 128
      %350 = vsyncadd [#allocation6], %s349
      %s352 = sshll.u32 [#allocation10], 4
      %s353 = int_to_ptr.vmem [resolvable:$true] %s352
      %355 = dma.vmem_to_hbm [thread:$0]  %s353, 128, %s4, [#allocation6]
    $region33: #{tpu_custom_call.1} parent=1 // pred_fallthru
      _
    // Predicated region
    $region34: #{tpu_custom_call.1} parent=1 // pred_check
      _
    $region35: #{tpu_custom_call.1} parent=1 // pred_check_branch
      %357 = sbr.rel (0) target = $region37
    $region36: #{tpu_custom_call.1} parent=1 // pred_region
      %358 = dma.done [#allocation6], 128
    $region37: #{tpu_custom_call.1} parent=1 // pred_fallthru
      _
    %359 = vsyncpa [#allocation5], 1
    %360 = vsyncpa [#allocation8], 1
    %361 = vsyncpa [#allocation6], 1

</llo_original>
